<compile_context>
chip_gen: v7x
topology: tpu7x:2x2x1
jax: 0.10.0
libtpu: 0.0.40
codegen_flags: <defaults>
</compile_context>

<pallas_src>
import functools

import jax
import jax.numpy as jnp
from jax import lax
from jax.experimental import pallas as pl
from jax.experimental.pallas import tpu as pltpu

FILTER_SIZES = (2, 3, 4, 5, 6)
K_MAX = max(FILTER_SIZES)
N_FS = len(FILTER_SIZES)
BN_EPS = 1e-5


def _round_up(x, m):
    return (x + m - 1) // m * m


def _branch_kernel(lout_ref, x_ref, w_ref, p_ref, out_ref, *, B, Lc_pad, F):
    """One grid step = one conv branch (one filter size).

    lout_ref : SMEM (n_fs,) int32   per-branch conv output length (max_len - fs + 1)
    x_ref    : VMEM (M, Ktot) bf16  im2col input (constant block index -> fetched once)
    w_ref    : VMEM (1, Ktot, F) bf16  this branch's conv weights (taps k >= fs zeroed)
    p_ref    : VMEM (1, 8, F) f32   packed rows: 0 bias, 1 gamma, 2 beta, 3 lin_w, 4 lin_b
    out_ref  : VMEM (B, 1) f32      resident logit accumulator / final sigmoid output
    """
    i = pl.program_id(0)
    n_br = pl.num_programs(0)
    lout = lout_ref[i]                                             # int32 scalar (SMEM)

    prm = p_ref[0]                                                 # (8, F) f32
    bias, gamma, beta, lw = prm[0:1], prm[1:2], prm[2:3], prm[3:4]  # (1, F) rows

    # ---- Conv1d (this branch, all taps) as one im2col matmul on the MXU ----
    conv = jnp.dot(x_ref[...], w_ref[0], preferred_element_type=jnp.float32)   # (M, F) f32
    relu = jnp.maximum(conv + bias, 0.0).reshape(B, Lc_pad, F)

    # ---- validity / pool masks from an in-kernel iota vs the scalar l_out ----
    pos = lax.broadcasted_iota(jnp.int32, (Lc_pad, F), 0)          # (Lc_pad, F)
    valid = (pos < lout).astype(jnp.float32)                       # valid conv positions
    poolm = pos < (lout - 1)                                       # MaxPool1d(max_len - fs) window

    # ---- BatchNorm1d training-mode batch stats, folded into one scale/shift ----
    inv_cnt = 1.0 / (jnp.float32(B) * lout.astype(jnp.float32))    # count = B * l_out
    rv = relu * valid                                              # (B, Lc_pad, F)
    mean = jnp.sum(jnp.sum(rv, axis=1, keepdims=True), axis=0, keepdims=True) * inv_cnt
    ex2 = jnp.sum(jnp.sum(rv * rv, axis=1, keepdims=True), axis=0, keepdims=True) * inv_cnt
    var = ex2 - mean * mean                                        # biased variance (1,1,F)
    scale = lax.rsqrt(var + BN_EPS) * gamma.reshape(1, 1, F)
    shift = beta.reshape(1, 1, F) - mean * scale
    bn = relu * scale + shift                                      # (B, Lc_pad, F)

    # ---- MaxPool window + Linear partial, vectorized over the batch ----
    pooled = jnp.max(jnp.where(poolm, bn, jnp.float32(-1e30)), axis=1)   # (B, F)
    plogit = jnp.sum(pooled * lw, axis=1, keepdims=True)           # (B, 1) partial logit

    @pl.when(i == 0)
    def _():
        out_ref[...] = jnp.zeros_like(out_ref)

    out_ref[...] = out_ref[...] + plogit

    @pl.when(i == n_br - 1)
    def _():
        lb = prm[4:5, 0:1]                                         # (1, 1) linear bias
        z = out_ref[...] + lb
        out_ref[...] = 1.0 / (1.0 + jnp.exp(-z))


def detection_model_forward(x, params, *, max_len):
    B, C_in, L = x.shape
    assert L == max_len
    assert max_len > K_MAX, "MaxPool1d(max_len - fs) window must be >= 1"
    F = params['conv_w'].shape[-1]
    Lc = max_len - 1                       # longest conv output (fs = 2)
    Lc_pad = _round_up(Lc, 8)              # sublane-aligned rows per batch sample
    M = B * Lc_pad
    Ktot = K_MAX * C_in

    # ---- host-side prep (fused by XLA under jit): channels-last, pad, im2col, bf16 ----
    x_cl = jnp.transpose(x, (0, 2, 1)).astype(jnp.float32)                # (B, L, C_in)
    x_pad = jnp.pad(x_cl, ((0, 0), (0, Lc_pad + K_MAX - 1 - L), (0, 0)))  # (B, Lc_pad+K-1, C_in)
    cols = [x_pad[:, k:k + Lc_pad, :] for k in range(K_MAX)]
    x2 = jnp.concatenate(cols, axis=-1).reshape(M, Ktot).astype(jnp.bfloat16)

    # per-branch weight slabs (n_fs, Ktot, F); taps k >= fs zeroed (contiguous per-branch DMA)
    fs = jnp.asarray(FILTER_SIZES, jnp.int32)
    tap_mask = (jnp.arange(K_MAX)[None, :] < fs[:, None]).astype(params['conv_w'].dtype)
    w3 = (params['conv_w'] * tap_mask[:, :, None, None]).reshape(N_FS, Ktot, F).astype(jnp.bfloat16)

    # packed per-branch parameter rows: one (n_fs, 8, F) input instead of 6 tiny DMAs
    pp = jnp.zeros((N_FS, 8, F), jnp.float32)
    pp = pp.at[:, 0, :].set(params['conv_b'].reshape(N_FS, F))
    pp = pp.at[:, 1, :].set(params['gamma'].reshape(N_FS, F))
    pp = pp.at[:, 2, :].set(params['beta'].reshape(N_FS, F))
    pp = pp.at[:, 3, :].set(params['lin_w'].reshape(N_FS, F))    # torch.cat order == branch*F + f
    pp = pp.at[:, 4, :].set(jnp.broadcast_to(params['lin_b'].reshape(1, 1), (N_FS, F)))

    lout_arr = jnp.asarray([max_len - f + 1 for f in FILTER_SIZES], jnp.int32)   # (n_fs,) SMEM

    kern = functools.partial(_branch_kernel, B=B, Lc_pad=Lc_pad, F=F)
    out = pl.pallas_call(
        kern,
        out_shape=jax.ShapeDtypeStruct((B, 1), jnp.float32),
        grid_spec=pltpu.PrefetchScalarGridSpec(
            num_scalar_prefetch=1,
            grid=(N_FS,),
            in_specs=[
                pl.BlockSpec((M, Ktot), lambda i, lo: (0, 0)),       # x2: same block every step
                pl.BlockSpec((1, Ktot, F), lambda i, lo: (i, 0, 0)),  # per-branch weights
                pl.BlockSpec((1, 8, F), lambda i, lo: (i, 0, 0)),     # packed per-branch params
            ],
            out_specs=pl.BlockSpec((B, 1), lambda i, lo: (0, 0)),     # resident accumulator
        ),
        compiler_params=pltpu.CompilerParams(dimension_semantics=("arbitrary",)),
    )(lout_arr, x2, w3, pp)
    return out[:, 0]                                               # (B,)


def reference(x, params):
    """Pure-JAX f32 reproduction of the PyTorch forward (for verification)."""
    B, C_in, L = x.shape
    x_cl = jnp.transpose(x, (0, 2, 1)).astype(jnp.float32)
    outs = []
    for idx, fs in enumerate(FILTER_SIZES):
        L_out = L - fs + 1
        conv = jnp.zeros((B, L_out, params['conv_w'].shape[-1]), jnp.float32)
        for k in range(fs):
            conv = conv + jnp.einsum('blc,cf->blf', x_cl[:, k:k + L_out, :],
                                     params['conv_w'][idx, k])
        conv = conv + params['conv_b'][idx, 0]
        relu = jnp.maximum(conv, 0.0)
        mean = jnp.mean(relu, axis=(0, 1))
        var = jnp.var(relu, axis=(0, 1))
        bn = (relu - mean) / jnp.sqrt(var + BN_EPS) * params['gamma'][idx, 0] + params['beta'][idx, 0]
        pooled = jnp.max(bn[:, :L - fs, :], axis=1)                # MaxPool1d(L - fs)
        outs.append(pooled)
    flat = jnp.concatenate(outs, axis=1)
    logit = flat @ params['lin_w'] + params['lin_b'][0]
    return jax.nn.sigmoid(logit)[:, 0]


if __name__ == "__main__":
    # Small shapes consistent with the module: input_size(C_in)=128, max_len=32,
    # num_filters=128, filter_size=[2,3,4,5,6], batch=2.
    B, C_in, F, MAX_LEN = 2, 128, 128, 32

    key = jax.random.PRNGKey(0)
    ks = jax.random.split(key, 7)

    w_full = jax.random.normal(ks[0], (N_FS, K_MAX, C_in, F), jnp.float32) * 0.05
    tap_mask = (jnp.arange(K_MAX)[None, :] < jnp.array(FILTER_SIZES)[:, None]).astype(jnp.float32)
    params = {
        'conv_w': w_full * tap_mask[:, :, None, None],             # taps >= fs zeroed
        'conv_b': jax.random.normal(ks[1], (N_FS, 1, F), jnp.float32) * 0.05,
        'gamma': 1.0 + 0.1 * jax.random.normal(ks[2], (N_FS, 1, F), jnp.float32),
        'beta': 0.1 * jax.random.normal(ks[3], (N_FS, 1, F), jnp.float32),
        'lin_w': jax.random.normal(ks[4], (N_FS * F, 1), jnp.float32) * 0.05,
        'lin_b': jax.random.normal(ks[5], (1, 1), jnp.float32) * 0.05,
    }
    x = jax.random.normal(ks[6], (B, C_in, MAX_LEN), jnp.float32)

    fwd = jax.jit(functools.partial(detection_model_forward, max_len=MAX_LEN))
    out = jax.block_until_ready(fwd(x, params))

    ref = jax.block_until_ready(reference(x, params))
    assert out.shape == (B,), out.shape
    # bf16 conv inputs (f32 accumulation) vs f32 reference -> slightly looser tolerance.
    assert jnp.allclose(out, ref, rtol=2e-2, atol=2e-2), (out, ref)
    print("KERNEL_OK")
</pallas_src>

<mosaic_0001>
module attributes {stable_mosaic.version = 11 : i64} {
  func.func @_branch_kernel(%arg0: i32, %arg1: memref<5xi32, #tpu.memory_space<smem>>, %arg2: memref<64x768xbf16, #tpu.memory_space<vmem>>, %arg3: memref<1x768x128xbf16, #tpu.memory_space<vmem>>, %arg4: memref<1x8x128xf32, #tpu.memory_space<vmem>>, %arg5: memref<2x1xf32, #tpu.memory_space<vmem>>) attributes {dimension_semantics = [#tpu.dimension_semantics<arbitrary>], iteration_bounds = array<i64: 5>, scalar_prefetch = 1 : i64, scratch_operands = 0 : i64, tpu.core_type = #tpu.core_type<tc>, window_params = [{pipeline_mode = #tpu.pipeline_mode<synchronous>, transform_indices = @transform_0, window_bounds = array<i64: 64, 768>}, {transform_indices = @transform_1, window_bounds = array<i64: 1, 768, 128>}, {transform_indices = @transform_2, window_bounds = array<i64: 1, 8, 128>}, {pipeline_mode = #tpu.pipeline_mode<synchronous>, transform_indices = @transform_3, window_bounds = array<i64: 2, 1>}]} {
    %0 = arith.index_cast %arg0 : i32 to index
    %1 = memref.load %arg1[%0] : memref<5xi32, #tpu.memory_space<smem>>
    %c0 = arith.constant 0 : index
    %c0_0 = arith.constant 0 : index
    %c0_1 = arith.constant 0 : index
    %2 = vector.load %arg4[%c0, %c0_0, %c0_1] : memref<1x8x128xf32, #tpu.memory_space<vmem>>, vector<1x8x128xf32>
    %3 = vector.shape_cast %2 : vector<1x8x128xf32> to vector<8x128xf32>
    %4 = vector.extract_strided_slice %3 {offsets = [0, 0], sizes = [1, 128], strides = [1, 1]} : vector<8x128xf32> to vector<1x128xf32>
    %5 = vector.extract_strided_slice %3 {offsets = [1, 0], sizes = [1, 128], strides = [1, 1]} : vector<8x128xf32> to vector<1x128xf32>
    %6 = vector.extract_strided_slice %3 {offsets = [2, 0], sizes = [1, 128], strides = [1, 1]} : vector<8x128xf32> to vector<1x128xf32>
    %7 = vector.extract_strided_slice %3 {offsets = [3, 0], sizes = [1, 128], strides = [1, 1]} : vector<8x128xf32> to vector<1x128xf32>
    %c0_2 = arith.constant 0 : index
    %c0_3 = arith.constant 0 : index
    %8 = vector.load %arg2[%c0_2, %c0_3] : memref<64x768xbf16, #tpu.memory_space<vmem>>, vector<64x768xbf16>
    %c0_4 = arith.constant 0 : index
    %c0_5 = arith.constant 0 : index
    %c0_6 = arith.constant 0 : index
    %9 = vector.load %arg3[%c0_4, %c0_5, %c0_6] : memref<1x768x128xbf16, #tpu.memory_space<vmem>>, vector<1x768x128xbf16>
    %10 = vector.shape_cast %9 : vector<1x768x128xbf16> to vector<768x128xbf16>
    %cst = arith.constant dense<0.000000e+00> : vector<64x128xf32>
    %11 = tpu.matmul %8, %10, %cst {dimension_numbers = #tpu.dot_dimension_numbers<[1], [0], [0], [1], [0, 0, 1, 1], [], []>} : vector<64x768xbf16>, vector<768x128xbf16>, vector<64x128xf32> -> vector<64x128xf32>
    %12 = vector.broadcast %4 : vector<1x128xf32> to vector<64x128xf32>
    %13 = arith.addf %11, %12 : vector<64x128xf32>
    %cst_7 = arith.constant 0.000000e+00 : f32
    %14 = vector.broadcast %cst_7 : f32 to vector<64x128xf32>
    %15 = arith.maximumf %13, %14 : vector<64x128xf32>
    %16 = vector.shape_cast %15 : vector<64x128xf32> to vector<2x32x128xf32>
    %17 = tpu.iota {dimensions = array<i32: 0>} : vector<32x128xi32>
    %18 = vector.broadcast %1 : i32 to vector<32x128xi32>
    %19 = arith.cmpi slt, %17, %18 : vector<32x128xi32>
    %20 = arith.extui %19 : vector<32x128xi1> to vector<32x128xi32>
    %21 = arith.sitofp %20 : vector<32x128xi32> to vector<32x128xf32>
    %c1_i32 = arith.constant 1 : i32
    %22 = arith.subi %1, %c1_i32 : i32
    %23 = vector.broadcast %22 : i32 to vector<32x128xi32>
    %24 = arith.cmpi slt, %17, %23 : vector<32x128xi32>
    %25 = arith.sitofp %1 : i32 to f32
    %cst_8 = arith.constant 2.000000e+00 : f32
    %26 = arith.mulf %cst_8, %25 : f32
    %cst_9 = arith.constant 1.000000e+00 : f32
    %27 = arith.divf %cst_9, %26 : f32
    %28 = vector.shape_cast %21 : vector<32x128xf32> to vector<1x32x128xf32>
    %29 = vector.broadcast %28 : vector<1x32x128xf32> to vector<2x32x128xf32>
    %30 = arith.mulf %16, %29 : vector<2x32x128xf32>
    %cst_10 = arith.constant dense<0.000000e+00> : vector<2x128xf32>
    %31 = vector.multi_reduction <add>, %30, %cst_10 [1] : vector<2x32x128xf32> to vector<2x128xf32>
    %32 = vector.shape_cast %31 : vector<2x128xf32> to vector<2x1x128xf32>
    %cst_11 = arith.constant dense<0.000000e+00> : vector<1x128xf32>
    %33 = vector.multi_reduction <add>, %32, %cst_11 [0] : vector<2x1x128xf32> to vector<1x128xf32>
    %34 = vector.shape_cast %33 : vector<1x128xf32> to vector<1x1x128xf32>
    %35 = vector.broadcast %27 : f32 to vector<1x1x128xf32>
    %36 = arith.mulf %34, %35 : vector<1x1x128xf32>
    %37 = arith.mulf %30, %30 : vector<2x32x128xf32>
    %cst_12 = arith.constant dense<0.000000e+00> : vector<2x128xf32>
    %38 = vector.multi_reduction <add>, %37, %cst_12 [1] : vector<2x32x128xf32> to vector<2x128xf32>
    %39 = vector.shape_cast %38 : vector<2x128xf32> to vector<2x1x128xf32>
    %cst_13 = arith.constant dense<0.000000e+00> : vector<1x128xf32>
    %40 = vector.multi_reduction <add>, %39, %cst_13 [0] : vector<2x1x128xf32> to vector<1x128xf32>
    %41 = vector.shape_cast %40 : vector<1x128xf32> to vector<1x1x128xf32>
    %42 = vector.broadcast %27 : f32 to vector<1x1x128xf32>
    %43 = arith.mulf %41, %42 : vector<1x1x128xf32>
    %44 = arith.mulf %36, %36 : vector<1x1x128xf32>
    %45 = arith.subf %43, %44 : vector<1x1x128xf32>
    %cst_14 = arith.constant 9.99999974E-6 : f32
    %46 = vector.broadcast %cst_14 : f32 to vector<1x1x128xf32>
    %47 = arith.addf %45, %46 : vector<1x1x128xf32>
    %48 = math.rsqrt %47 : vector<1x1x128xf32>
    %49 = vector.shape_cast %5 : vector<1x128xf32> to vector<1x1x128xf32>
    %50 = arith.mulf %48, %49 : vector<1x1x128xf32>
    %51 = vector.shape_cast %6 : vector<1x128xf32> to vector<1x1x128xf32>
    %52 = arith.mulf %36, %50 : vector<1x1x128xf32>
    %53 = arith.subf %51, %52 : vector<1x1x128xf32>
    %54 = vector.broadcast %50 : vector<1x1x128xf32> to vector<2x32x128xf32>
    %55 = arith.mulf %16, %54 : vector<2x32x128xf32>
    %56 = vector.broadcast %53 : vector<1x1x128xf32> to vector<2x32x128xf32>
    %57 = arith.addf %55, %56 : vector<2x32x128xf32>
    %cst_15 = arith.constant -1.000000e+30 : f32
    %58 = vector.shape_cast %24 : vector<32x128xi1> to vector<1x32x128xi1>
    %59 = vector.broadcast %58 : vector<1x32x128xi1> to vector<2x32x128xi1>
    %60 = vector.broadcast %cst_15 : f32 to vector<2x32x128xf32>
    %61 = arith.select %59, %57, %60 : vector<2x32x128xi1>, vector<2x32x128xf32>
    %cst_16 = arith.constant dense<0xFF800000> : vector<2x128xf32>
    %62 = vector.multi_reduction <maximumf>, %61, %cst_16 [1] : vector<2x32x128xf32> to vector<2x128xf32>
    %63 = vector.broadcast %7 : vector<1x128xf32> to vector<2x128xf32>
    %64 = arith.mulf %62, %63 : vector<2x128xf32>
    %cst_17 = arith.constant dense<0.000000e+00> : vector<2xf32>
    %65 = vector.multi_reduction <add>, %64, %cst_17 [1] : vector<2x128xf32> to vector<2xf32>
    %66 = vector.shape_cast %65 : vector<2xf32> to vector<2x1xf32>
    %c0_i32 = arith.constant 0 : i32
    %67 = arith.cmpi eq, %arg0, %c0_i32 : i32
    %68 = arith.extui %67 : i1 to i32
    %c0_i32_18 = arith.constant 0 : i32
    %69 = arith.cmpi ne, %68, %c0_i32_18 : i32
    scf.if %69 {
      %cst_24 = arith.constant 0.000000e+00 : f32
      %76 = vector.broadcast %cst_24 : f32 to vector<2x1xf32>
      %c0_25 = arith.constant 0 : index
      %c0_26 = arith.constant 0 : index
      %77 = vector.load %arg5[%c0_25, %c0_26] : memref<2x1xf32, #tpu.memory_space<vmem>>, vector<2x1xf32>
      tpu.vector_store %arg5[%c0_25, %c0_26], %76 {strides = array<i32>} : memref<2x1xf32, #tpu.memory_space<vmem>>, vector<2x1xf32>,
    } else {
    }
    %c0_19 = arith.constant 0 : index
    %c0_20 = arith.constant 0 : index
    %70 = vector.load %arg5[%c0_19, %c0_20] : memref<2x1xf32, #tpu.memory_space<vmem>>, vector<2x1xf32>
    %71 = arith.addf %70, %66 : vector<2x1xf32>
    %c0_21 = arith.constant 0 : index
    %c0_22 = arith.constant 0 : index
    %72 = vector.load %arg5[%c0_21, %c0_22] : memref<2x1xf32, #tpu.memory_space<vmem>>, vector<2x1xf32>
    tpu.vector_store %arg5[%c0_21, %c0_22], %71 {strides = array<i32>} : memref<2x1xf32, #tpu.memory_space<vmem>>, vector<2x1xf32>,
    %c4_i32 = arith.constant 4 : i32
    %73 = arith.cmpi eq, %arg0, %c4_i32 : i32
    %74 = arith.extui %73 : i1 to i32
    %c0_i32_23 = arith.constant 0 : i32
    %75 = arith.cmpi ne, %74, %c0_i32_23 : i32
    scf.if %75 {
      %76 = vector.extract_strided_slice %3 {offsets = [4, 0], sizes = [1, 1], strides = [1, 1]} : vector<8x128xf32> to vector<1x1xf32>
      %c0_24 = arith.constant 0 : index
      %c0_25 = arith.constant 0 : index
      %77 = vector.load %arg5[%c0_24, %c0_25] : memref<2x1xf32, #tpu.memory_space<vmem>>, vector<2x1xf32>
      %78 = vector.broadcast %76 : vector<1x1xf32> to vector<2x1xf32>
      %79 = arith.addf %77, %78 : vector<2x1xf32>
      %cst_26 = arith.constant 0.000000e+00 : f32
      %80 = vector.broadcast %cst_26 : f32 to vector<2x1xf32>
      %81 = arith.subf %80, %79 : vector<2x1xf32>
      %82 = math.exp %81 : vector<2x1xf32>
      %cst_27 = arith.constant 1.000000e+00 : f32
      %83 = vector.broadcast %cst_27 : f32 to vector<2x1xf32>
      %84 = arith.addf %83, %82 : vector<2x1xf32>
      %cst_28 = arith.constant 1.000000e+00 : f32
      %85 = vector.broadcast %cst_28 : f32 to vector<2x1xf32>
      %86 = arith.divf %85, %84 : vector<2x1xf32>
      %c0_29 = arith.constant 0 : index
      %c0_30 = arith.constant 0 : index
      %87 = vector.load %arg5[%c0_29, %c0_30] : memref<2x1xf32, #tpu.memory_space<vmem>>, vector<2x1xf32>
      tpu.vector_store %arg5[%c0_29, %c0_30], %86 {strides = array<i32>} : memref<2x1xf32, #tpu.memory_space<vmem>>, vector<2x1xf32>,
    } else {
    }
    return
  }
  func.func @transform_0(%arg0: i32, %arg1: memref<5xi32, #tpu.memory_space<smem>>) -> (i32, i32) {
    %c0_i32 = arith.constant 0 : i32
    %c0_i32_0 = arith.constant 0 : i32
    %c0_i32_1 = arith.constant 0 : i32
    return %c0_i32, %c0_i32_0 : i32, i32
  }
  func.func @transform_1(%arg0: i32, %arg1: memref<5xi32, #tpu.memory_space<smem>>) -> (i32, i32, i32) {
    %c0_i32 = arith.constant 0 : i32
    %c0_i32_0 = arith.constant 0 : i32
    %c0_i32_1 = arith.constant 0 : i32
    return %arg0, %c0_i32, %c0_i32_0 : i32, i32, i32
  }
  func.func @transform_2(%arg0: i32, %arg1: memref<5xi32, #tpu.memory_space<smem>>) -> (i32, i32, i32) {
    %c0_i32 = arith.constant 0 : i32
    %c0_i32_0 = arith.constant 0 : i32
    %c0_i32_1 = arith.constant 0 : i32
    return %arg0, %c0_i32, %c0_i32_0 : i32, i32, i32
  }
  func.func @transform_3(%arg0: i32, %arg1: memref<5xi32, #tpu.memory_space<smem>>) -> (i32, i32) {
    %c0_i32 = arith.constant 0 : i32
    %c0_i32_0 = arith.constant 0 : i32
    %c0_i32_1 = arith.constant 0 : i32
    return %c0_i32, %c0_i32_0 : i32, i32
  }
}

</mosaic_0001>

<llo_original>
// kernel: detection_model_forward.1
$region0: #{detection_model_forward.1}
  #allocation0 [shape = 'u32[]', space=smem, size = 0x4, offset = 0x4, fixed_abs, tag = 'smem constant byte address 0x4 - core index']
  #allocation1 [shape = 'u32[144,128]{1,0:T(1,128)}', space=vmem, size = 0x12000, scoped, tag = 'internal scratch']
  #allocation2 [shape = 's32[1]{0}', space=sflag, size = 0x4, scoped, tag = 'scoped memory for detection_model_forward.1']
  #allocation3 [shape = 'u8[512]{0}', space=smem, size = 0x200, scoped, tag = 'prefetched SMEM operand 0']
  %s0 = inlined_call_operand.vmem [shape: s32[5], index: 0, kind: input, shape index: {}]
  %s1 = inlined_call_operand.vmem [shape: bf16[64,768], index: 1, kind: input, shape index: {}]
  %s2 = inlined_call_operand.vmem [shape: bf16[5,768,128], index: 2, kind: input, shape index: {}]
  %s3 = inlined_call_operand.vmem [shape: f32[5,8,128], index: 3, kind: input, shape index: {}]
  %s4 = inlined_call_operand.vmem [shape: f32[2,1], index: 4, kind: output, shape index: {}]
  %s5 = sld [smem:[#allocation0]]
  $region53: #{detection_model_forward.1} parent=0
    _
  %s7 = ssub.s32 1, %s5
  %s8 = scalar_select 0, %s7, %s5
  %s9 = sshll.u32 %s0, 4
  %s10 = int_to_ptr.vmem [resolvable:$true] %s9
  %12 = dma.vmem_to_smem %s10, 16, [#allocation3], [#allocation2]
  %13 = dma.done [#allocation2], 16
  %14 = sfence
  loop: start=0, step=1, limit=7
  $region2: #{detection_model_forward.1} parent=0 // loop_pre_header
    _
  $region3: #{detection_model_forward.1} parent=0 // loop_header
    %s16 = sphi 0, %s20
    %p17 = scmp.ge.s32.totalorder %s16, 7
    %s24 = sphi 0, %s24
    %s26 = sphi 0, %s24
    %s27 = sphi 0, %s26
    %s41 = sphi 0, %s27
    %s47 = sphi 0, %s49
    %s50 = sphi 0, %s47
    %s51 = sphi 0, %s50
    %s67 = sphi 0, %s51
    %s73 = sphi 0, %s75
    %s76 = sphi 0, %s73
    %s77 = sphi 0, %s76
    %s93 = sphi 0, %s77
    %s97 = sphi 0, %s97
    %s99 = sphi 0, %s97
    %s100 = sphi 0, %s99
    %s114 = sphi 0, %s100
  $region4: #{detection_model_forward.1} parent=0 // loop_header_branch
    %19 = sbr.rel (%p17) target = $region8
  $region5: #{detection_model_forward.1} parent=0 // loop_body
    %s21 = ssub.s32 %s16, 1
    %s22 = ssub.s32 %s16, 2
    %s23 = sadd.s32 %s16, 1
    %s25 = sadd.s32 %s24, 1
    %p28 = scmp.eq.s32.totalorder %s16, 4
    %p29 = scmp.ne.s32.totalorder %s24, %s26
    %p30 = scmp.eq.s32.totalorder %s16, 0
    %p31 = por %p29, %p30
    %p32 = scmp.ne.s32.totalorder %s24, %s26
    %p33 = scmp.eq.s32.totalorder %s21, 4
    %p34 = por %p32, %p33
    %p35 = scmp.ne.s32.totalorder %s26, %s27
    %p36 = scmp.eq.s32.totalorder %s21, 0
    %p37 = por %p35, %p36
    %p38 = scmp.ne.s32.totalorder %s26, %s27
    %p39 = scmp.eq.s32.totalorder %s22, 4
    %p40 = por %p38, %p39
    %p42 = scmp.ne.s32.totalorder %s27, %s41
    %p43 = scmp.eq.s32.totalorder %s22, 0
    %p44 = por %p42, %p43
    %s45 = ssub.s32 %s16, %s23
    %p46 = scmp.eq.s32.totalorder %s45, 0
    %s48 = sadd.s32 %s47, 1
    %s49 = scalar_select %p46, %s47, %s48
    %p52 = pneg %p46
    %p53 = scmp.eq.s32.totalorder %s16, 4
    %p54 = por %p52, %p53
    %p55 = scmp.ne.s32.totalorder %s47, %s50
    %p56 = scmp.eq.s32.totalorder %s16, 0
    %p57 = por %p55, %p56
    %p58 = scmp.ne.s32.totalorder %s47, %s50
    %p59 = scmp.eq.s32.totalorder %s21, 4
    %p60 = por %p58, %p59
    %p61 = scmp.ne.s32.totalorder %s50, %s51
    %p62 = scmp.eq.s32.totalorder %s21, 0
    %p63 = por %p61, %p62
    %p64 = scmp.ne.s32.totalorder %s50, %s51
    %p65 = scmp.eq.s32.totalorder %s22, 4
    %p66 = por %p64, %p65
    %p68 = scmp.ne.s32.totalorder %s51, %s67
    %p69 = scmp.eq.s32.totalorder %s22, 0
    %p70 = por %p68, %p69
    %s71 = ssub.s32 %s16, %s23
    %p72 = scmp.eq.s32.totalorder %s71, 0
    %s74 = sadd.s32 %s73, 1
    %s75 = scalar_select %p72, %s73, %s74
    %p78 = pneg %p72
    %p79 = scmp.eq.s32.totalorder %s16, 4
    %p80 = por %p78, %p79
    %p81 = scmp.ne.s32.totalorder %s73, %s76
    %p82 = scmp.eq.s32.totalorder %s16, 0
    %p83 = por %p81, %p82
    %p84 = scmp.ne.s32.totalorder %s73, %s76
    %p85 = scmp.eq.s32.totalorder %s21, 4
    %p86 = por %p84, %p85
    %p87 = scmp.ne.s32.totalorder %s76, %s77
    %p88 = scmp.eq.s32.totalorder %s21, 0
    %p89 = por %p87, %p88
    %p90 = scmp.ne.s32.totalorder %s76, %s77
    %p91 = scmp.eq.s32.totalorder %s22, 4
    %p92 = por %p90, %p91
    %p94 = scmp.ne.s32.totalorder %s77, %s93
    %p95 = scmp.eq.s32.totalorder %s22, 0
    %p96 = por %p94, %p95
    %s98 = sadd.s32 %s97, 1
    %p101 = scmp.eq.s32.totalorder %s16, 4
    %p102 = scmp.ne.s32.totalorder %s97, %s99
    %p103 = scmp.eq.s32.totalorder %s16, 0
    %p104 = por %p102, %p103
    %p105 = scmp.ne.s32.totalorder %s97, %s99
    %p106 = scmp.eq.s32.totalorder %s21, 4
    %p107 = por %p105, %p106
    %p108 = scmp.ne.s32.totalorder %s99, %s100
    %p109 = scmp.eq.s32.totalorder %s21, 0
    %p110 = por %p108, %p109
    %p111 = scmp.ne.s32.totalorder %s99, %s100
    %p112 = scmp.eq.s32.totalorder %s22, 4
    %p113 = por %p111, %p112
    %p115 = scmp.ne.s32.totalorder %s100, %s114
    %p116 = scmp.eq.s32.totalorder %s22, 0
    %p117 = por %p115, %p116
    %p118 = scmp.le.s32.totalorder 1, %s16
    %p119 = scmp.lt.s32.totalorder %s16, 6
    %p120 = pnand %p118, %p119
    %p121 = pneg %p120
    // Predicated region
    $region9: #{detection_model_forward.1} parent=5 // pred_check
      _
    $region10: #{detection_model_forward.1} parent=5 // pred_check_branch
      %123 = sbr.rel (%p120) target = $region12
    $region11: #{detection_model_forward.1} parent=5 // pred_region
      %s124 = ssub.s32 %s16, 1
      // Predicated region
      $region13: #{detection_model_forward.1} parent=11 // pred_check
        %p125 = pneg %p37
      $region14: #{detection_model_forward.1} parent=11 // pred_check_branch
        %127 = sbr.rel (%p125) target = $region16
      $region15: #{detection_model_forward.1} parent=11 // pred_region
        _
      $region16: #{detection_model_forward.1} parent=11 // pred_fallthru
        _
    $region12: #{detection_model_forward.1} parent=5 // pred_fallthru
      _
    %p128 = scmp.lt.s32.totalorder %s16, 5
    // Predicated region
    $region17: #{detection_model_forward.1} parent=5 // pred_check
      %p129 = pneg %p128
    $region18: #{detection_model_forward.1} parent=5 // pred_check_branch
      %131 = sbr.rel (%p129) target = $region20
    $region19: #{detection_model_forward.1} parent=5 // pred_region
      // Predicated region
      $region21: #{detection_model_forward.1} parent=19 // pred_check
        %p132 = pneg %p57
      $region22: #{detection_model_forward.1} parent=19 // pred_check_branch
        %134 = sbr.rel (%p132) target = $region24
      $region23: #{detection_model_forward.1} parent=19 // pred_region
        %p135 = scmp.lt.s32.totalorder %s16, 4
        %s136 = scalar_select %p135, %s16, 4
        %s137 = smul.addr %s136, 96
        %s138 = smul.addr %s137, 4
        %s139 = scalar_lea.vmem %s2, %s138
      $region24: #{detection_model_forward.1} parent=19 // pred_fallthru
        _
      // Predicated region
      $region25: #{detection_model_forward.1} parent=19 // pred_check
        %p140 = pneg %p83
      $region26: #{detection_model_forward.1} parent=19 // pred_check_branch
        %142 = sbr.rel (%p140) target = $region28
      $region27: #{detection_model_forward.1} parent=19 // pred_region
        %p143 = scmp.lt.s32.totalorder %s16, 4
        %s144 = scalar_select %p143, %s16, 4
        %s145 = smul.addr %s144, 8
        %s146 = scalar_lea.vmem %s3, %s145
      $region28: #{detection_model_forward.1} parent=19 // pred_fallthru
        _
    $region20: #{detection_model_forward.1} parent=5 // pred_fallthru
      _
    %p147 = scmp.le.s32.totalorder 1, %s16
    %p148 = scmp.lt.s32.totalorder %s16, 6
    %p149 = pnand %p147, %p148
    %p150 = pneg %p149
    // Predicated region
    $region29: #{detection_model_forward.1} parent=5 // pred_check
      _
    $region30: #{detection_model_forward.1} parent=5 // pred_check_branch
      %152 = sbr.rel (%p149) target = $region32
    $region31: #{detection_model_forward.1} parent=5 // pred_region
      %s153 = ssub.s32 %s16, 1
      %p154 = pneg %p37
      %p155 = pneg %p34
      %p156 = scmp.lt.s32.totalorder %s21, 4
      %s157 = scalar_select %p156, %s21, 4
      %s158 = smul.addr %s157, 96
      %s159 = smul.addr %s158, 4
      %s160 = scalar_lea.vmem %s2, %s159
      %p161 = pneg %p63
      %p162 = pneg %p60
      %p163 = scmp.lt.s32.totalorder %s21, 4
      %s164 = scalar_select %p163, %s21, 4
      %s165 = smul.addr %s164, 8
      %s166 = scalar_lea.vmem %s3, %s165
      %p167 = pneg %p89
      %p168 = pneg %p86
      %p169 = pneg %p110
      %p170 = pneg %p107
      %p171 = scmp.lt.s32.totalorder %s21, 4
      %s172 = scalar_select %p171, %s21, 4
      %s173 = smul.addr %s172, 96
      %s174 = smul.addr %s173, 4
      %s175 = scalar_lea.vmem %s2, %s174
      %p176 = scmp.lt.s32.totalorder %s21, 4
      %s177 = scalar_select %p176, %s21, 4
      %s178 = smul.addr %s177, 8
      %s179 = scalar_lea.vmem %s3, %s178
      %s181 = sld [smem:[#allocation3 + %s21]]
      %v182 = vld [vmem:[%s179] sm:$0xff]
      %v183 = vld [vmem:[%s1] sm:$0xff]
      %v184 = vld [vmem:[%s1 + $0x8] sm:$0xff]
      %v185 = vld [vmem:[%s1 + $0x10] sm:$0xff]
      %v186 = vld [vmem:[%s1 + $0x18] sm:$0xff]
      %v187 = vld [vmem:[%s1 + $0x20] sm:$0xff]
      %v188 = vld [vmem:[%s1 + $0x28] sm:$0xff]
      %v189 = vld [vmem:[%s1 + $0x30] sm:$0xff]
      %v190 = vld [vmem:[%s1 + $0x38] sm:$0xff]
      %v191 = vld [vmem:[%s1 + $0x40] sm:$0xff]
      %v192 = vld [vmem:[%s1 + $0x48] sm:$0xff]
      %v193 = vld [vmem:[%s1 + $0x50] sm:$0xff]
      %v194 = vld [vmem:[%s1 + $0x58] sm:$0xff]
      %v195 = vld [vmem:[%s1 + $0x60] sm:$0xff]
      %v196 = vld [vmem:[%s1 + $0x68] sm:$0xff]
      %v197 = vld [vmem:[%s1 + $0x70] sm:$0xff]
      %v198 = vld [vmem:[%s1 + $0x78] sm:$0xff]
      %v199 = vld [vmem:[%s1 + $0x80] sm:$0xff]
      %v200 = vld [vmem:[%s1 + $0x88] sm:$0xff]
      %v201 = vld [vmem:[%s1 + $0x90] sm:$0xff]
      %v202 = vld [vmem:[%s1 + $0x98] sm:$0xff]
      %v203 = vld [vmem:[%s1 + $0xa0] sm:$0xff]
      %v204 = vld [vmem:[%s1 + $0xa8] sm:$0xff]
      %v205 = vld [vmem:[%s1 + $0xb0] sm:$0xff]
      %v206 = vld [vmem:[%s1 + $0xb8] sm:$0xff]
      %v207 = vld [vmem:[%s175] sm:$0xf]
      %v208 = vld [vmem:[%s175 + $0x4] sm:$0xf]
      %v209 = vld [vmem:[%s175 + $0x8] sm:$0xf]
      %v210 = vld [vmem:[%s175 + $0xc] sm:$0xf]
      %v211 = vld [vmem:[%s175 + $0x10] sm:$0xf]
      %v212 = vld [vmem:[%s175 + $0x14] sm:$0xf]
      %v213 = vld [vmem:[%s175 + $0x18] sm:$0xf]
      %v214 = vld [vmem:[%s175 + $0x1c] sm:$0xf]
      %v215 = vld [vmem:[%s175 + $0x20] sm:$0xf]
      %v216 = vld [vmem:[%s175 + $0x24] sm:$0xf]
      %v217 = vld [vmem:[%s175 + $0x28] sm:$0xf]
      %v218 = vld [vmem:[%s175 + $0x2c] sm:$0xf]
      %v219 = vld [vmem:[%s175 + $0x30] sm:$0xf]
      %v220 = vld [vmem:[%s175 + $0x34] sm:$0xf]
      %v221 = vld [vmem:[%s175 + $0x38] sm:$0xf]
      %v222 = vld [vmem:[%s175 + $0x3c] sm:$0xf]
      %v223 = vld [vmem:[%s175 + $0x40] sm:$0xf]
      %v224 = vld [vmem:[%s175 + $0x44] sm:$0xf]
      %v225 = vld [vmem:[%s175 + $0x48] sm:$0xf]
      %v226 = vld [vmem:[%s175 + $0x4c] sm:$0xf]
      %v227 = vld [vmem:[%s175 + $0x50] sm:$0xf]
      %v228 = vld [vmem:[%s175 + $0x54] sm:$0xf]
      %v229 = vld [vmem:[%s175 + $0x58] sm:$0xf]
      %v230 = vld [vmem:[%s175 + $0x5c] sm:$0xf]
      %v231 = vld [vmem:[%s175 + $0x60] sm:$0xf]
      %v232 = vld [vmem:[%s175 + $0x64] sm:$0xf]
      %v233 = vld [vmem:[%s175 + $0x68] sm:$0xf]
      %v234 = vld [vmem:[%s175 + $0x6c] sm:$0xf]
      %v235 = vld [vmem:[%s175 + $0x70] sm:$0xf]
      %v236 = vld [vmem:[%s175 + $0x74] sm:$0xf]
      %v237 = vld [vmem:[%s175 + $0x78] sm:$0xf]
      %v238 = vld [vmem:[%s175 + $0x7c] sm:$0xf]
      %v239 = vld [vmem:[%s175 + $0x80] sm:$0xf]
      %v240 = vld [vmem:[%s175 + $0x84] sm:$0xf]
      %v241 = vld [vmem:[%s175 + $0x88] sm:$0xf]
      %v242 = vld [vmem:[%s175 + $0x8c] sm:$0xf]
      %v243 = vld [vmem:[%s175 + $0x90] sm:$0xf]
      %v244 = vld [vmem:[%s175 + $0x94] sm:$0xf]
      %v245 = vld [vmem:[%s175 + $0x98] sm:$0xf]
      %v246 = vld [vmem:[%s175 + $0x9c] sm:$0xf]
      %v247 = vld [vmem:[%s175 + $0xa0] sm:$0xf]
      %v248 = vld [vmem:[%s175 + $0xa4] sm:$0xf]
      %v249 = vld [vmem:[%s175 + $0xa8] sm:$0xf]
      %v250 = vld [vmem:[%s175 + $0xac] sm:$0xf]
      %v251 = vld [vmem:[%s175 + $0xb0] sm:$0xf]
      %v252 = vld [vmem:[%s175 + $0xb4] sm:$0xf]
      %v253 = vld [vmem:[%s175 + $0xb8] sm:$0xf]
      %v254 = vld [vmem:[%s175 + $0xbc] sm:$0xf]
      %v255 = vld [vmem:[%s175 + $0xc0] sm:$0xf]
      %v256 = vld [vmem:[%s175 + $0xc4] sm:$0xf]
      %v257 = vld [vmem:[%s175 + $0xc8] sm:$0xf]
      %v258 = vld [vmem:[%s175 + $0xcc] sm:$0xf]
      %v259 = vld [vmem:[%s175 + $0xd0] sm:$0xf]
      %v260 = vld [vmem:[%s175 + $0xd4] sm:$0xf]
      %v261 = vld [vmem:[%s175 + $0xd8] sm:$0xf]
      %v262 = vld [vmem:[%s175 + $0xdc] sm:$0xf]
      %v263 = vld [vmem:[%s175 + $0xe0] sm:$0xf]
      %v264 = vld [vmem:[%s175 + $0xe4] sm:$0xf]
      %v265 = vld [vmem:[%s175 + $0xe8] sm:$0xf]
      %v266 = vld [vmem:[%s175 + $0xec] sm:$0xf]
      %v267 = vld [vmem:[%s175 + $0xf0] sm:$0xf]
      %v268 = vld [vmem:[%s175 + $0xf4] sm:$0xf]
      %v269 = vld [vmem:[%s175 + $0xf8] sm:$0xf]
      %v270 = vld [vmem:[%s175 + $0xfc] sm:$0xf]
      %v271 = vld [vmem:[%s175 + $0x100] sm:$0xf]
      %v272 = vld [vmem:[%s175 + $0x104] sm:$0xf]
      %v273 = vld [vmem:[%s175 + $0x108] sm:$0xf]
      %v274 = vld [vmem:[%s175 + $0x10c] sm:$0xf]
      %v275 = vld [vmem:[%s175 + $0x110] sm:$0xf]
      %v276 = vld [vmem:[%s175 + $0x114] sm:$0xf]
      %v277 = vld [vmem:[%s175 + $0x118] sm:$0xf]
      %v278 = vld [vmem:[%s175 + $0x11c] sm:$0xf]
      %v279 = vld [vmem:[%s175 + $0x120] sm:$0xf]
      %v280 = vld [vmem:[%s175 + $0x124] sm:$0xf]
      %v281 = vld [vmem:[%s175 + $0x128] sm:$0xf]
      %v282 = vld [vmem:[%s175 + $0x12c] sm:$0xf]
      %v283 = vld [vmem:[%s175 + $0x130] sm:$0xf]
      %v284 = vld [vmem:[%s175 + $0x134] sm:$0xf]
      %v285 = vld [vmem:[%s175 + $0x138] sm:$0xf]
      %v286 = vld [vmem:[%s175 + $0x13c] sm:$0xf]
      %v287 = vld [vmem:[%s175 + $0x140] sm:$0xf]
      %v288 = vld [vmem:[%s175 + $0x144] sm:$0xf]
      %v289 = vld [vmem:[%s175 + $0x148] sm:$0xf]
      %v290 = vld [vmem:[%s175 + $0x14c] sm:$0xf]
      %v291 = vld [vmem:[%s175 + $0x150] sm:$0xf]
      %v292 = vld [vmem:[%s175 + $0x154] sm:$0xf]
      %v293 = vld [vmem:[%s175 + $0x158] sm:$0xf]
      %v294 = vld [vmem:[%s175 + $0x15c] sm:$0xf]
      %v295 = vld [vmem:[%s175 + $0x160] sm:$0xf]
      %v296 = vld [vmem:[%s175 + $0x164] sm:$0xf]
      %v297 = vld [vmem:[%s175 + $0x168] sm:$0xf]
      %v298 = vld [vmem:[%s175 + $0x16c] sm:$0xf]
      %v299 = vld [vmem:[%s175 + $0x170] sm:$0xf]
      %v300 = vld [vmem:[%s175 + $0x174] sm:$0xf]
      %v301 = vld [vmem:[%s175 + $0x178] sm:$0xf]
      %v302 = vld [vmem:[%s175 + $0x17c] sm:$0xf]
      %v303 = vlaneseq
      %v304 = vshrl.u32 %v303, 7
      %v305 = vsub.s32 0, %v304
      %v306 = vrot.slane %v182, %v305
      %v331 = vunpack.c.l.b16 %v183
      %v332 = vunpack.c.h.b16 %v183
      %v333 = vunpack.c.l.b16 %v184
      %v334 = vunpack.c.h.b16 %v184
      %v335 = vunpack.c.l.b16 %v185
      %v336 = vunpack.c.h.b16 %v185
      %v337 = vunpack.c.l.b16 %v186
      %v338 = vunpack.c.h.b16 %v186
      %v339 = vunpack.c.l.b16 %v187
      %v340 = vunpack.c.h.b16 %v187
      %v341 = vunpack.c.l.b16 %v188
      %v342 = vunpack.c.h.b16 %v188
      %v343 = vunpack.c.l.b16 %v189
      %v344 = vunpack.c.h.b16 %v189
      %v345 = vunpack.c.l.b16 %v190
      %v346 = vunpack.c.h.b16 %v190
      %v347 = vunpack.c.l.b16 %v191
      %v348 = vunpack.c.h.b16 %v191
      %v349 = vunpack.c.l.b16 %v192
      %v350 = vunpack.c.h.b16 %v192
      %v351 = vunpack.c.l.b16 %v193
      %v352 = vunpack.c.h.b16 %v193
      %v353 = vunpack.c.l.b16 %v194
      %v354 = vunpack.c.h.b16 %v194
      %v355 = vunpack.c.l.b16 %v195
      %v356 = vunpack.c.h.b16 %v195
      %v357 = vunpack.c.l.b16 %v196
      %v358 = vunpack.c.h.b16 %v196
      %v359 = vunpack.c.l.b16 %v197
      %v360 = vunpack.c.h.b16 %v197
      %v361 = vunpack.c.l.b16 %v198
      %v362 = vunpack.c.h.b16 %v198
      %v363 = vunpack.c.l.b16 %v199
      %v364 = vunpack.c.h.b16 %v199
      %v365 = vunpack.c.l.b16 %v200
      %v366 = vunpack.c.h.b16 %v200
      %v367 = vunpack.c.l.b16 %v201
      %v368 = vunpack.c.h.b16 %v201
      %v369 = vunpack.c.l.b16 %v202
      %v370 = vunpack.c.h.b16 %v202
      %v371 = vunpack.c.l.b16 %v203
      %v372 = vunpack.c.h.b16 %v203
      %v373 = vunpack.c.l.b16 %v204
      %v374 = vunpack.c.h.b16 %v204
      %v375 = vunpack.c.l.b16 %v205
      %v376 = vunpack.c.h.b16 %v205
      %v377 = vunpack.c.l.b16 %v206
      %v378 = vunpack.c.h.b16 %v206
      %v379 = vpack.c.b16 %v337, %v331
      %v380 = vpack.c.b16 %v338, %v332
      %v381 = vpack.c.b16 %v339, %v333
      %v382 = vpack.c.b16 %v340, %v334
      %v383 = vpack.c.b16 %v341, %v335
      %v384 = vpack.c.b16 %v342, %v336
      %v385 = vpack.c.b16 %v349, %v343
      %v386 = vpack.c.b16 %v350, %v344
      %v387 = vpack.c.b16 %v351, %v345
      %v388 = vpack.c.b16 %v352, %v346
      %v389 = vpack.c.b16 %v353, %v347
      %v390 = vpack.c.b16 %v354, %v348
      %v391 = vpack.c.b16 %v361, %v355
      %v392 = vpack.c.b16 %v362, %v356
      %v393 = vpack.c.b16 %v363, %v357
      %v394 = vpack.c.b16 %v364, %v358
      %v395 = vpack.c.b16 %v365, %v359
      %v396 = vpack.c.b16 %v366, %v360
      %v397 = vpack.c.b16 %v373, %v367
      %v398 = vpack.c.b16 %v374, %v368
      %v399 = vpack.c.b16 %v375, %v369
      %v400 = vpack.c.b16 %v376, %v370
      %v401 = vpack.c.b16 %v377, %v371
      %v402 = vpack.c.b16 %v378, %v372
      %v523 = vunpack.c.l.b16 %v207
      %v524 = vunpack.c.l.b16 %v208
      %v525 = vunpack.c.l.b16 %v209
      %v526 = vunpack.c.l.b16 %v210
      %v527 = vunpack.c.l.b16 %v211
      %v528 = vunpack.c.l.b16 %v212
      %v529 = vunpack.c.l.b16 %v213
      %v530 = vunpack.c.l.b16 %v214
      %v531 = vunpack.c.l.b16 %v215
      %v532 = vunpack.c.l.b16 %v216
      %v533 = vunpack.c.l.b16 %v217
      %v534 = vunpack.c.l.b16 %v218
      %v535 = vunpack.c.l.b16 %v219
      %v536 = vunpack.c.l.b16 %v220
      %v537 = vunpack.c.l.b16 %v221
      %v538 = vunpack.c.l.b16 %v222
      %v539 = vunpack.c.l.b16 %v223
      %v540 = vunpack.c.l.b16 %v224
      %v541 = vunpack.c.l.b16 %v225
      %v542 = vunpack.c.l.b16 %v226
      %v543 = vunpack.c.l.b16 %v227
      %v544 = vunpack.c.l.b16 %v228
      %v545 = vunpack.c.l.b16 %v229
      %v546 = vunpack.c.l.b16 %v230
      %v547 = vunpack.c.l.b16 %v231
      %v548 = vunpack.c.l.b16 %v232
      %v549 = vunpack.c.l.b16 %v233
      %v550 = vunpack.c.l.b16 %v234
      %v551 = vunpack.c.l.b16 %v235
      %v552 = vunpack.c.l.b16 %v236
      %v553 = vunpack.c.l.b16 %v237
      %v554 = vunpack.c.l.b16 %v238
      %v555 = vunpack.c.l.b16 %v239
      %v556 = vunpack.c.l.b16 %v240
      %v557 = vunpack.c.l.b16 %v241
      %v558 = vunpack.c.l.b16 %v242
      %v559 = vunpack.c.l.b16 %v243
      %v560 = vunpack.c.l.b16 %v244
      %v561 = vunpack.c.l.b16 %v245
      %v562 = vunpack.c.l.b16 %v246
      %v563 = vunpack.c.l.b16 %v247
      %v564 = vunpack.c.l.b16 %v248
      %v565 = vunpack.c.l.b16 %v249
      %v566 = vunpack.c.l.b16 %v250
      %v567 = vunpack.c.l.b16 %v251
      %v568 = vunpack.c.l.b16 %v252
      %v569 = vunpack.c.l.b16 %v253
      %v570 = vunpack.c.l.b16 %v254
      %v571 = vunpack.c.l.b16 %v255
      %v572 = vunpack.c.l.b16 %v256
      %v573 = vunpack.c.l.b16 %v257
      %v574 = vunpack.c.l.b16 %v258
      %v575 = vunpack.c.l.b16 %v259
      %v576 = vunpack.c.l.b16 %v260
      %v577 = vunpack.c.l.b16 %v261
      %v578 = vunpack.c.l.b16 %v262
      %v579 = vunpack.c.l.b16 %v263
      %v580 = vunpack.c.l.b16 %v264
      %v581 = vunpack.c.l.b16 %v265
      %v582 = vunpack.c.l.b16 %v266
      %v583 = vunpack.c.l.b16 %v267
      %v584 = vunpack.c.l.b16 %v268
      %v585 = vunpack.c.l.b16 %v269
      %v586 = vunpack.c.l.b16 %v270
      %v587 = vunpack.c.l.b16 %v271
      %v588 = vunpack.c.l.b16 %v272
      %v589 = vunpack.c.l.b16 %v273
      %v590 = vunpack.c.l.b16 %v274
      %v591 = vunpack.c.l.b16 %v275
      %v592 = vunpack.c.l.b16 %v276
      %v593 = vunpack.c.l.b16 %v277
      %v594 = vunpack.c.l.b16 %v278
      %v595 = vunpack.c.l.b16 %v279
      %v596 = vunpack.c.l.b16 %v280
      %v597 = vunpack.c.l.b16 %v281
      %v598 = vunpack.c.l.b16 %v282
      %v599 = vunpack.c.l.b16 %v283
      %v600 = vunpack.c.l.b16 %v284
      %v601 = vunpack.c.l.b16 %v285
      %v602 = vunpack.c.l.b16 %v286
      %v603 = vunpack.c.l.b16 %v287
      %v604 = vunpack.c.l.b16 %v288
      %v605 = vunpack.c.l.b16 %v289
      %v606 = vunpack.c.l.b16 %v290
      %v607 = vunpack.c.l.b16 %v291
      %v608 = vunpack.c.l.b16 %v292
      %v609 = vunpack.c.l.b16 %v293
      %v610 = vunpack.c.l.b16 %v294
      %v611 = vunpack.c.l.b16 %v295
      %v612 = vunpack.c.l.b16 %v296
      %v613 = vunpack.c.l.b16 %v297
      %v614 = vunpack.c.l.b16 %v298
      %v615 = vunpack.c.l.b16 %v299
      %v616 = vunpack.c.l.b16 %v300
      %v617 = vunpack.c.l.b16 %v301
      %v618 = vunpack.c.l.b16 %v302
      %v619 = vpack.c.b16 %v524, %v523
      %v620 = vpack.c.b16 %v526, %v525
      %v621 = vpack.c.b16 %v528, %v527
      %v622 = vpack.c.b16 %v530, %v529
      %v623 = vpack.c.b16 %v532, %v531
      %v624 = vpack.c.b16 %v534, %v533
      %v625 = vpack.c.b16 %v536, %v535
      %v626 = vpack.c.b16 %v538, %v537
      %v627 = vpack.c.b16 %v540, %v539
      %v628 = vpack.c.b16 %v542, %v541
      %v629 = vpack.c.b16 %v544, %v543
      %v630 = vpack.c.b16 %v546, %v545
      %v631 = vpack.c.b16 %v548, %v547
      %v632 = vpack.c.b16 %v550, %v549
      %v633 = vpack.c.b16 %v552, %v551
      %v634 = vpack.c.b16 %v554, %v553
      %v635 = vpack.c.b16 %v556, %v555
      %v636 = vpack.c.b16 %v558, %v557
      %v637 = vpack.c.b16 %v560, %v559
      %v638 = vpack.c.b16 %v562, %v561
      %v639 = vpack.c.b16 %v564, %v563
      %v640 = vpack.c.b16 %v566, %v565
      %v641 = vpack.c.b16 %v568, %v567
      %v642 = vpack.c.b16 %v570, %v569
      %v643 = vpack.c.b16 %v572, %v571
      %v644 = vpack.c.b16 %v574, %v573
      %v645 = vpack.c.b16 %v576, %v575
      %v646 = vpack.c.b16 %v578, %v577
      %v647 = vpack.c.b16 %v580, %v579
      %v648 = vpack.c.b16 %v582, %v581
      %v649 = vpack.c.b16 %v584, %v583
      %v650 = vpack.c.b16 %v586, %v585
      %v651 = vpack.c.b16 %v588, %v587
      %v652 = vpack.c.b16 %v590, %v589
      %v653 = vpack.c.b16 %v592, %v591
      %v654 = vpack.c.b16 %v594, %v593
      %v655 = vpack.c.b16 %v596, %v595
      %v656 = vpack.c.b16 %v598, %v597
      %v657 = vpack.c.b16 %v600, %v599
      %v658 = vpack.c.b16 %v602, %v601
      %v659 = vpack.c.b16 %v604, %v603
      %v660 = vpack.c.b16 %v606, %v605
      %v661 = vpack.c.b16 %v608, %v607
      %v662 = vpack.c.b16 %v610, %v609
      %v663 = vpack.c.b16 %v612, %v611
      %v664 = vpack.c.b16 %v614, %v613
      %v665 = vpack.c.b16 %v616, %v615
      %v666 = vpack.c.b16 %v618, %v617
      %715 = vmatprep.subr.bf16.mxu0 0
      %716 = vmatpush1.bf16.msra.mxu0 %v619
      %717 = vmatprep.subr.bf16.mxu0 0
      %718 = vmatpush1.bf16.msra.mxu0 %v620
      %719 = vmatprep.subr.bf16.mxu0 0
      %720 = vmatpush1.bf16.msra.mxu0 %v621
      %721 = vmatprep.subr.bf16.mxu0 0
      %722 = vmatpush1.bf16.msra.mxu0 %v622
      %723 = vmatprep.subr.bf16.mxu0 0
      %724 = vmatpush1.bf16.msra.mxu0 %v623
      %725 = vmatprep.subr.bf16.mxu0 0
      %726 = vmatpush1.bf16.msra.mxu0 %v624
      %727 = vmatprep.subr.bf16.mxu0 0
      %728 = vmatpush1.bf16.msra.mxu0 %v625
      %729 = vmatprep.subr.bf16.mxu0 0
      %730 = vmatpush1.bf16.msra.mxu0 %v626
      %731 = vmatprep.subr.bf16.mxu0 0
      %732 = vmatpush1.bf16.msra.mxu0 %v627
      %733 = vmatprep.subr.bf16.mxu0 0
      %734 = vmatpush1.bf16.msra.mxu0 %v628
      %735 = vmatprep.subr.bf16.mxu0 0
      %736 = vmatpush1.bf16.msra.mxu0 %v629
      %737 = vmatprep.subr.bf16.mxu0 0
      %738 = vmatpush1.bf16.msra.mxu0 %v630
      %739 = vmatprep.subr.bf16.mxu0 0
      %740 = vmatpush1.bf16.msra.mxu0 %v631
      %741 = vmatprep.subr.bf16.mxu0 0
      %742 = vmatpush1.bf16.msra.mxu0 %v632
      %743 = vmatprep.subr.bf16.mxu0 0
      %744 = vmatpush1.bf16.msra.mxu0 %v633
      %745 = vmatprep.subr.bf16.mxu0 0
      %746 = vmatpush1.bf16.msra.mxu0 %v634
      %747 = vmatprep.mubr.bf16.mxu0 %v380
      %748 = vmatmul.mubr.bf16.gmra.mrb[0].mxu0 %v379
      %v749 = vpop.f32.mrb[0].mxu0
      %v750 = vadd.f32 %v306, %v749
      %v751 = vpop.f32.mrb[0].mxu0
      %v752 = vpop.f32.mrb[0].mxu0
      %v753 = vadd.f32 %v306, %v752
      %v754 = vpop.f32.mrb[0].mxu0
      %755 = vmatprep.mubr.bf16.mxu0 %v386
      %756 = vmatmul.mubr.bf16.gmra.mrb[0].mxu0 %v385
      %v757 = vpop.f32.mrb[0].mxu0
      %v758 = vadd.f32 %v306, %v757
      %v759 = vpop.f32.mrb[0].mxu0
      %v760 = vpop.f32.mrb[0].mxu0
      %v761 = vadd.f32 %v306, %v760
      %v762 = vpop.f32.mrb[0].mxu0
      %763 = vmatprep.mubr.bf16.mxu0 %v392
      %764 = vmatmul.mubr.bf16.gmra.mrb[0].mxu0 %v391
      %v765 = vpop.f32.mrb[0].mxu0
      %v766 = vadd.f32 %v306, %v765
      %v767 = vpop.f32.mrb[0].mxu0
      %v768 = vpop.f32.mrb[0].mxu0
      %v769 = vadd.f32 %v306, %v768
      %v770 = vpop.f32.mrb[0].mxu0
      %771 = vmatprep.mubr.bf16.mxu0 %v398
      %772 = vmatmul.mubr.bf16.gmra.mrb[0].mxu0 %v397
      %v773 = vpop.f32.mrb[0].mxu0
      %v774 = vadd.f32 %v306, %v773
      %v775 = vpop.f32.mrb[0].mxu0
      %v776 = vpop.f32.mrb[0].mxu0
      %v777 = vadd.f32 %v306, %v776
      %v778 = vpop.f32.mrb[0].mxu0
      %779 = vdwg.mxu0
      %780 = vmatprep.subr.bf16.mxu0 0
      %781 = vmatpush1.bf16.msra.mxu0 %v635
      %782 = vmatprep.subr.bf16.mxu0 0
      %783 = vmatpush1.bf16.msra.mxu0 %v636
      %784 = vmatprep.subr.bf16.mxu0 0
      %785 = vmatpush1.bf16.msra.mxu0 %v637
      %786 = vmatprep.subr.bf16.mxu0 0
      %787 = vmatpush1.bf16.msra.mxu0 %v638
      %788 = vmatprep.subr.bf16.mxu0 0
      %789 = vmatpush1.bf16.msra.mxu0 %v639
      %790 = vmatprep.subr.bf16.mxu0 0
      %791 = vmatpush1.bf16.msra.mxu0 %v640
      %792 = vmatprep.subr.bf16.mxu0 0
      %793 = vmatpush1.bf16.msra.mxu0 %v641
      %794 = vmatprep.subr.bf16.mxu0 0
      %795 = vmatpush1.bf16.msra.mxu0 %v642
      %796 = vmatprep.subr.bf16.mxu0 0
      %797 = vmatpush1.bf16.msra.mxu0 %v643
      %798 = vmatprep.subr.bf16.mxu0 0
      %799 = vmatpush1.bf16.msra.mxu0 %v644
      %800 = vmatprep.subr.bf16.mxu0 0
      %801 = vmatpush1.bf16.msra.mxu0 %v645
      %802 = vmatprep.subr.bf16.mxu0 0
      %803 = vmatpush1.bf16.msra.mxu0 %v646
      %804 = vmatprep.subr.bf16.mxu0 0
      %805 = vmatpush1.bf16.msra.mxu0 %v647
      %806 = vmatprep.subr.bf16.mxu0 0
      %807 = vmatpush1.bf16.msra.mxu0 %v648
      %808 = vmatprep.subr.bf16.mxu0 0
      %809 = vmatpush1.bf16.msra.mxu0 %v649
      %810 = vmatprep.subr.bf16.mxu0 0
      %811 = vmatpush1.bf16.msra.mxu0 %v650
      %812 = vmatprep.mubr.bf16.mxu0 %v382
      %813 = vmatmul.mubr.bf16.gmra.mrb[0].mxu0 %v381
      %v814 = vpop.f32.mrb[0].mxu0
      %v815 = vadd.f32 %v750, %v814
      %v816 = vpop.f32.mrb[0].mxu0
      %v817 = vpop.f32.mrb[0].mxu0
      %v818 = vadd.f32 %v753, %v817
      %v819 = vpop.f32.mrb[0].mxu0
      %820 = vmatprep.mubr.bf16.mxu0 %v388
      %821 = vmatmul.mubr.bf16.gmra.mrb[0].mxu0 %v387
      %v822 = vpop.f32.mrb[0].mxu0
      %v823 = vadd.f32 %v758, %v822
      %v824 = vpop.f32.mrb[0].mxu0
      %v825 = vpop.f32.mrb[0].mxu0
      %v826 = vadd.f32 %v761, %v825
      %v827 = vpop.f32.mrb[0].mxu0
      %828 = vmatprep.mubr.bf16.mxu0 %v394
      %829 = vmatmul.mubr.bf16.gmra.mrb[0].mxu0 %v393
      %v830 = vpop.f32.mrb[0].mxu0
      %v831 = vadd.f32 %v766, %v830
      %v832 = vpop.f32.mrb[0].mxu0
      %v833 = vpop.f32.mrb[0].mxu0
      %v834 = vadd.f32 %v769, %v833
      %v835 = vpop.f32.mrb[0].mxu0
      %836 = vmatprep.mubr.bf16.mxu0 %v400
      %837 = vmatmul.mubr.bf16.gmra.mrb[0].mxu0 %v399
      %v838 = vpop.f32.mrb[0].mxu0
      %v839 = vadd.f32 %v774, %v838
      %v840 = vpop.f32.mrb[0].mxu0
      %v841 = vpop.f32.mrb[0].mxu0
      %v842 = vadd.f32 %v777, %v841
      %v843 = vpop.f32.mrb[0].mxu0
      %844 = vdwg.mxu0
      %845 = vmatprep.subr.bf16.mxu0 0
      %846 = vmatpush1.bf16.msra.mxu0 %v651
      %847 = vmatprep.subr.bf16.mxu0 0
      %848 = vmatpush1.bf16.msra.mxu0 %v652
      %849 = vmatprep.subr.bf16.mxu0 0
      %850 = vmatpush1.bf16.msra.mxu0 %v653
      %851 = vmatprep.subr.bf16.mxu0 0
      %852 = vmatpush1.bf16.msra.mxu0 %v654
      %853 = vmatprep.subr.bf16.mxu0 0
      %854 = vmatpush1.bf16.msra.mxu0 %v655
      %855 = vmatprep.subr.bf16.mxu0 0
      %856 = vmatpush1.bf16.msra.mxu0 %v656
      %857 = vmatprep.subr.bf16.mxu0 0
      %858 = vmatpush1.bf16.msra.mxu0 %v657
      %859 = vmatprep.subr.bf16.mxu0 0
      %860 = vmatpush1.bf16.msra.mxu0 %v658
      %861 = vmatprep.subr.bf16.mxu0 0
      %862 = vmatpush1.bf16.msra.mxu0 %v659
      %863 = vmatprep.subr.bf16.mxu0 0
      %864 = vmatpush1.bf16.msra.mxu0 %v660
      %865 = vmatprep.subr.bf16.mxu0 0
      %866 = vmatpush1.bf16.msra.mxu0 %v661
      %867 = vmatprep.subr.bf16.mxu0 0
      %868 = vmatpush1.bf16.msra.mxu0 %v662
      %869 = vmatprep.subr.bf16.mxu0 0
      %870 = vmatpush1.bf16.msra.mxu0 %v663
      %871 = vmatprep.subr.bf16.mxu0 0
      %872 = vmatpush1.bf16.msra.mxu0 %v664
      %873 = vmatprep.subr.bf16.mxu0 0
      %874 = vmatpush1.bf16.msra.mxu0 %v665
      %875 = vmatprep.subr.bf16.mxu0 0
      %876 = vmatpush1.bf16.msra.mxu0 %v666
      %877 = vmatprep.mubr.bf16.mxu0 %v384
      %878 = vmatmul.mubr.bf16.gmra.mrb[0].mxu0 %v383
      %v879 = vpop.f32.mrb[0].mxu0
      %v880 = vadd.f32 %v815, %v879
      %v881 = vpop.f32.mrb[0].mxu0
      %v882 = vpop.f32.mrb[0].mxu0
      %v883 = vadd.f32 %v818, %v882
      %v884 = vpop.f32.mrb[0].mxu0
      %885 = vmatprep.mubr.bf16.mxu0 %v390
      %886 = vmatmul.mubr.bf16.gmra.mrb[0].mxu0 %v389
      %v887 = vpop.f32.mrb[0].mxu0
      %v888 = vadd.f32 %v823, %v887
      %v889 = vpop.f32.mrb[0].mxu0
      %v890 = vpop.f32.mrb[0].mxu0
      %v891 = vadd.f32 %v826, %v890
      %v892 = vpop.f32.mrb[0].mxu0
      %893 = vmatprep.mubr.bf16.mxu0 %v396
      %894 = vmatmul.mubr.bf16.gmra.mrb[0].mxu0 %v395
      %v895 = vpop.f32.mrb[0].mxu0
      %v896 = vadd.f32 %v831, %v895
      %v897 = vpop.f32.mrb[0].mxu0
      %v898 = vpop.f32.mrb[0].mxu0
      %v899 = vadd.f32 %v834, %v898
      %v900 = vpop.f32.mrb[0].mxu0
      %901 = vmatprep.mubr.bf16.mxu0 %v402
      %902 = vmatmul.mubr.bf16.gmra.mrb[0].mxu0 %v401
      %v903 = vpop.f32.mrb[0].mxu0
      %v904 = vadd.f32 %v839, %v903
      %v905 = vpop.f32.mrb[0].mxu0
      %v906 = vpop.f32.mrb[0].mxu0
      %v907 = vadd.f32 %v842, %v906
      %v908 = vpop.f32.mrb[0].mxu0
      %909 = vdwg.mxu0
      %v910 = vmax.f32 %v880, 0.0
      %v911 = vmax.f32 %v883, 0.0
      %v912 = vmax.f32 %v888, 0.0
      %v913 = vmax.f32 %v891, 0.0
      %v914 = vmax.f32 %v896, 0.0
      %v915 = vmax.f32 %v899, 0.0
      %v916 = vmax.f32 %v904, 0.0
      %v917 = vmax.f32 %v907, 0.0
      %v918 = vlaneseq
      %v919 = vshrl.u32 %v918, 7
      %v920 = vadd.s32 %v919, 8
      %v921 = vadd.s32 %v919, 16
      %v922 = vadd.s32 %v919, 24
      %v923 = vstv %s181
      %vm924 = vcmp.lt.s32.totalorder %v919, %v923
      %vm925 = vcmp.lt.s32.totalorder %v920, %v923
      %vm926 = vcmp.lt.s32.totalorder %v921, %v923
      %vm927 = vcmp.lt.s32.totalorder %v922, %v923
      %v928 = vsel %vm924, 1, 0
      %v929 = vsel %vm925, 1, 0
      %v930 = vsel %vm926, 1, 0
      %v931 = vsel %vm927, 1, 0
      %v932 = vcvt.s32.f32 %v928
      %v933 = vcvt.s32.f32 %v929
      %v934 = vcvt.s32.f32 %v930
      %v935 = vcvt.s32.f32 %v931
      %s936 = ssub.s32 %s181, 1
      %v937 = vstv %s936
      %vm938 = vcmp.lt.s32.totalorder %v919, %v937
      %vm939 = vcmp.lt.s32.totalorder %v920, %v937
      %vm940 = vcmp.lt.s32.totalorder %v921, %v937
      %vm941 = vcmp.lt.s32.totalorder %v922, %v937
      %s942 = scvt.s32.f32 %s181
      %s943 = smul.f32 %s942, 2.0
      %v944 = vstv %s943
      %v945 = vrcp.pop %v944
      %s946 = vtos %v945
      %v947 = vmul.f32 %v910, %v932
      %v948 = vmul.f32 %v911, %v933
      %v949 = vmul.f32 %v912, %v934
      %v950 = vmul.f32 %v913, %v935
      %v951 = vmul.f32 %v914, %v932
      %v952 = vmul.f32 %v915, %v933
      %v953 = vmul.f32 %v916, %v934
      %v954 = vmul.f32 %v917, %v935
      %v955 = vadd.f32 %v947, %v948
      %v956 = vadd.f32 %v955, %v949
      %v957 = vadd.f32 %v956, %v950
      %v958 = vrot.slane %v957, 4
      %v959 = vadd.f32 %v957, %v958
      %v960 = vrot.slane %v959, 2
      %v961 = vadd.f32 %v959, %v960
      %v962 = vrot.slane %v961, 1
      %v963 = vadd.f32 %v961, %v962
      %v964 = vadd.f32 %v951, %v952
      %v965 = vadd.f32 %v964, %v953
      %v966 = vadd.f32 %v965, %v954
      %v967 = vrot.slane %v966, 4
      %v968 = vadd.f32 %v966, %v967
      %v969 = vrot.slane %v968, 2
      %v970 = vadd.f32 %v968, %v969
      %v971 = vrot.slane %v970, 1
      %v972 = vadd.f32 %v970, %v971
      %v973 = vadd.f32 %v963, %v972
      %v974 = vstv %s946
      %v975 = vmul.f32 %v973, %v974
      %v976 = vmul.f32 %v947, %v947
      %v977 = vmul.f32 %v948, %v948
      %v978 = vmul.f32 %v949, %v949
      %v979 = vmul.f32 %v950, %v950
      %v980 = vmul.f32 %v951, %v951
      %v981 = vmul.f32 %v952, %v952
      %v982 = vmul.f32 %v953, %v953
      %v983 = vmul.f32 %v954, %v954
      %v984 = vadd.f32 %v976, %v977
      %v985 = vadd.f32 %v984, %v978
      %v986 = vadd.f32 %v985, %v979
      %v987 = vrot.slane %v986, 4
      %v988 = vadd.f32 %v986, %v987
      %v989 = vrot.slane %v988, 2
      %v990 = vadd.f32 %v988, %v989
      %v991 = vrot.slane %v990, 1
      %v992 = vadd.f32 %v990, %v991
      %v993 = vadd.f32 %v980, %v981
      %v994 = vadd.f32 %v993, %v982
      %v995 = vadd.f32 %v994, %v983
      %v996 = vrot.slane %v995, 4
      %v997 = vadd.f32 %v995, %v996
      %v998 = vrot.slane %v997, 2
      %v999 = vadd.f32 %v997, %v998
      %v1000 = vrot.slane %v999, 1
      %v1001 = vadd.f32 %v999, %v1000
      %v1002 = vadd.f32 %v992, %v1001
      %v1003 = vmul.f32 %v1002, %v974
      %v1004 = vmul.f32 %v975, %v975
      %v1005 = vsub.f32 %v1003, %v1004
      %v1006 = vadd.f32 %v1005, 1e-05
      %v1007 = vrsqrt.pop %v1006
      %v1008 = vmul.f32 %v1007, %v182
      %v1009 = vmul.f32 %v975, %v1008
      %v1011 = vrot.slane %v1009, 7
      %v1013 = vsub.f32 %v182, %v1011
      %v1014 = vlaneseq
      %v1015 = vshrl.u32 %v1014, 7
      %v1016 = vsub.s32 1, %v1015
      %v1017 = vrot.slane %v1008, %v1016
      %v1018 = vmul.f32 %v910, %v1017
      %v1019 = vmul.f32 %v911, %v1017
      %v1020 = vmul.f32 %v912, %v1017
      %v1021 = vmul.f32 %v913, %v1017
      %v1022 = vmul.f32 %v914, %v1017
      %v1023 = vmul.f32 %v915, %v1017
      %v1024 = vmul.f32 %v916, %v1017
      %v1025 = vmul.f32 %v917, %v1017
      %v1026 = vlaneseq
      %v1027 = vshrl.u32 %v1026, 7
      %v1028 = vsub.s32 2, %v1027
      %v1029 = vrot.slane %v1013, %v1028
      %v1030 = vadd.f32 %v1018, %v1029
      %v1031 = vadd.f32 %v1019, %v1029
      %v1032 = vadd.f32 %v1020, %v1029
      %v1033 = vadd.f32 %v1021, %v1029
      %v1034 = vadd.f32 %v1022, %v1029
      %v1035 = vadd.f32 %v1023, %v1029
      %v1036 = vadd.f32 %v1024, %v1029
      %v1037 = vadd.f32 %v1025, %v1029
      %v1038 = vsel %vm938, 1, 0
      %v1039 = vsel %vm939, 1, 0
      %v1040 = vsel %vm940, 1, 0
      %v1041 = vsel %vm941, 1, 0
      %vm1042 = vcmp.eq.s32.totalorder %v1038, 1
      %vm1043 = vcmp.eq.s32.totalorder %v1039, 1
      %vm1044 = vcmp.eq.s32.totalorder %v1040, 1
      %vm1045 = vcmp.eq.s32.totalorder %v1041, 1
      %v1046 = vsel %vm1042, %v1030, -1e+30
      %v1047 = vsel %vm1043, %v1031, -1e+30
      %v1048 = vsel %vm1044, %v1032, -1e+30
      %v1049 = vsel %vm1045, %v1033, -1e+30
      %v1050 = vsel %vm1042, %v1034, -1e+30
      %v1051 = vsel %vm1043, %v1035, -1e+30
      %v1052 = vsel %vm1044, %v1036, -1e+30
      %v1053 = vsel %vm1045, %v1037, -1e+30
      %v1054 = vmax.f32 %v1046, %v1048
      %v1055 = vmax.f32 %v1047, %v1049
      %v1056 = vmax.f32 %v1054, %v1055
      %v1057 = vrot.slane %v1056, 4
      %v1058 = vmax.f32 %v1056, %v1057
      %v1059 = vrot.slane %v1058, 2
      %v1060 = vmax.f32 %v1058, %v1059
      %v1061 = vrot.slane %v1060, 1
      %v1062 = vmax.f32 %v1060, %v1061
      %v1063 = vmax.f32 %v1050, %v1052
      %v1064 = vmax.f32 %v1051, %v1053
      %v1065 = vmax.f32 %v1063, %v1064
      %v1066 = vrot.slane %v1065, 4
      %v1067 = vmax.f32 %v1065, %v1066
      %v1068 = vrot.slane %v1067, 2
      %v1069 = vmax.f32 %v1067, %v1068
      %v1070 = vrot.slane %v1069, 1
      %v1071 = vmax.f32 %v1069, %v1070
      %v1072 = vlaneseq
      %v1073 = vshrl.u32 %v1072, 7
      %v1074 = vsub.s32 3, %v1073
      %v1075 = vrot.slane %v182, %v1074
      %v1076 = vmul.f32 %v1062, %v1075
      %v1077 = vmul.f32 %v1071, %v1075
      %v1080 = vrot.slane %v1077, 7
      %vm1081 = vcmask 1041409
      %v1082 = vsel %vm1081, %v1080, %v1076
      %vm1084 = vcmask 1041408
      %v1085 = vsel %vm1084, %v1082, 0.0
      %1086 = vadd.xlane.f32.xlu0 %v1085
      %v1087 = vpop.xlane.xlu0 %1086
      %p1088 = scmp.eq.s32.totalorder %s21, 0
      // Predicated region
      $region33: #{detection_model_forward.1} parent=31 // pred_check
        %p1089 = pneg %p1088
      $region34: #{detection_model_forward.1} parent=31 // pred_check_branch
        %1091 = sbr.rel (%p1089) target = $region36
      $region35: #{detection_model_forward.1} parent=31 // pred_region
        %vm1092 = vcmask 1024
        %1093 = vst.msk [vmem:[%s4] sm:$0x3] %vm1092, 0.0
      $region36: #{detection_model_forward.1} parent=31 // pred_fallthru
        _
      %v1094 = vld [vmem:[%s4] sm:$0x3]
      %v1095 = vadd.f32 %v1094, %v1087
      %vm1096 = vcmask 1024
      %1097 = vst.msk [vmem:[%s4] sm:$0x3] %vm1096, %v1095
      %p1098 = scmp.eq.s32.totalorder %s21, 4
      // Predicated region
      $region37: #{detection_model_forward.1} parent=31 // pred_check
        %p1099 = pneg %p1098
      $region38: #{detection_model_forward.1} parent=31 // pred_check_branch
        %1101 = sbr.rel (%p1099) target = $region40
      $region39: #{detection_model_forward.1} parent=31 // pred_region
        %v1102 = vld [vmem:[%s4] sm:$0x3]
        %v1103 = vlaneseq
        %v1104 = vshrl.u32 %v1103, 7
        %v1105 = vsub.s32 4, %v1104
        %v1106 = vrot.slane %v182, %v1105
        %v1107 = vadd.f32 %v1102, %v1106
        %v1108 = vsub.f32 0.0, %v1107
        %v1109 = vmul.f32 %v1108, 1.442695
        %v1110 = vpow.pop %v1109
        %v1111 = vadd.f32 %v1110, 1.0
        %v1112 = vrcp.pop %v1111
        %v1113 = vmul.f32 1.0, %v1112
        %1114 = vst.msk [vmem:[%s4] sm:$0x3] %vm1096, %v1113
      $region40: #{detection_model_forward.1} parent=31 // pred_fallthru
        _
      // Predicated region
      $region41: #{detection_model_forward.1} parent=31 // pred_check
        %p1115 = pneg %p107
      $region42: #{detection_model_forward.1} parent=31 // pred_check_branch
        %1117 = sbr.rel (%p1115) target = $region44
      $region43: #{detection_model_forward.1} parent=31 // pred_region
        _
      $region44: #{detection_model_forward.1} parent=31 // pred_fallthru
        _
      // Predicated region
      $region45: #{detection_model_forward.1} parent=31 // pred_check
        %p1118 = pneg %p107
      $region46: #{detection_model_forward.1} parent=31 // pred_check_branch
        %1120 = sbr.rel (%p1118) target = $region48
      $region47: #{detection_model_forward.1} parent=31 // pred_region
        _
      $region48: #{detection_model_forward.1} parent=31 // pred_fallthru
        _
    $region32: #{detection_model_forward.1} parent=5 // pred_fallthru
      _
    %p1121 = scmp.le.s32.totalorder 2, %s16
    // Predicated region
    $region49: #{detection_model_forward.1} parent=5 // pred_check
      %p1122 = pneg %p1121
    $region50: #{detection_model_forward.1} parent=5 // pred_check_branch
      %1124 = sbr.rel (%p1122) target = $region52
    $region51: #{detection_model_forward.1} parent=5 // pred_region
      %s1125 = ssub.s32 %s16, 2
    $region52: #{detection_model_forward.1} parent=5 // pred_fallthru
      _
  $region6: #{detection_model_forward.1} parent=0 // loop_footer
    %s20 = sadd.s32 1, %s16
  $region7: #{detection_model_forward.1} parent=0 // loop_footer_branch
    %15 = sbr.rel target = $region3
  $region8: #{detection_model_forward.1} parent=0 // loop_exit
    _

</llo_original>
